<compile_context>
chip_gen: v5e
topology: v5e:2x2
jax: 0.10.0
libtpu: 0.0.40
codegen_flags: <defaults>
</compile_context>

<pallas_src>
import functools

import jax
import jax.numpy as jnp
from jax import lax
from jax.experimental import pallas as pl
from jax.experimental.pallas import tpu as pltpu

GAMMA = 1.5
ALPHA = 0.25
LANES = 128
MAX_TILE_ROWS = 2048       # 2048 * 128 * 4 B = 1 MiB per input block
NUM_CORE_SPLITS = 2        # leading "parallel" grid axis -> both TCs on v7x


def _focal_loss_kernel(pred_ref, true_ref, out_ref,
                       *, n_valid, tile_rows, steps_per_split):
    c = pl.program_id(0)           # core-split index
    j = pl.program_id(1)           # row-tile index within the split

    @pl.when(j == 0)
    def _():
        out_ref[...] = jnp.zeros_like(out_ref)

    # Intended (unclamped) global element indices of this block.  Blocks whose
    # indices fall past the valid range were clamped by the index_map (so the
    # DMA stays in bounds) and are fully zeroed out by this mask.
    block_idx = c * steps_per_split + j
    row0 = block_idx * tile_rows
    row_ids = row0 + lax.broadcasted_iota(jnp.int32, (tile_rows, LANES), 0)
    lane_ids = lax.broadcasted_iota(jnp.int32, (tile_rows, LANES), 1)
    flat_idx = row_ids * LANES + lane_ids
    mask = flat_idx < n_valid
    mask_f = mask.astype(jnp.float32)

    # Sanitize inputs so uninitialized/OOB lanes can never produce NaN/Inf.
    x = jnp.where(mask, pred_ref[...].astype(jnp.float32), 0.0)
    t = jnp.where(mask, true_ref[...].astype(jnp.float32), 0.0)

    # Stable BCE-with-logits; exp(-|x|) is reused for the sigmoid as well.
    e = jnp.exp(-jnp.abs(x))                              # EUP: exp (once)
    bce = jnp.maximum(x, 0.0) - x * t + jnp.log1p(e)      # EUP: log1p
    inv = pl.reciprocal(1.0 + e, approx=False)            # EUP: reciprocal
    p = jnp.where(x >= 0.0, inv, e * inv)                 # sigmoid(x)

    one_minus_pt = t * (1.0 - p) + (1.0 - t) * p          # = 1 - p_t
    z = jnp.maximum(one_minus_pt, 0.0)                    # clamp rounding
    modulating = z * jnp.sqrt(z)                          # z ** 1.5 (EUP: sqrt)
    alpha_factor = (t * ALPHA + (1.0 - t) * (1.0 - ALPHA)) * mask_f

    loss = bce * alpha_factor * modulating

    # Vreg-shaped partial sums: plain vector adds, no per-step XLU reduce.
    part = jnp.sum(loss.reshape(tile_rows // 8, 8, LANES), axis=0)
    out_ref[0] += part


def focal_loss(pred, true):
    """pred, true: float32 arrays of identical shape (e.g. NCHW).

    Returns the scalar mean focal loss (reduction='mean', as inherited from
    BCEWithLogitsLoss in yolov5's compute_loss).
    """
    assert pred.shape == true.shape
    n = int(pred.size)

    flat_p = pred.reshape(-1).astype(jnp.float32)
    flat_t = true.reshape(-1).astype(jnp.float32)

    # Only pad when the flat size is not a multiple of the lane width (needed
    # for the 2D reshape); padded elements are masked inside the kernel.
    rem = n % LANES
    if rem:
        pad = LANES - rem
        flat_p = jnp.concatenate([flat_p, jnp.zeros((pad,), flat_p.dtype)])
        flat_t = jnp.concatenate([flat_t, jnp.zeros((pad,), flat_t.dtype)])
    rows = flat_p.shape[0] // LANES

    p2d = flat_p.reshape(rows, LANES)
    t2d = flat_t.reshape(rows, LANES)

    # Big lane-dense blocks (<= 1 MiB per input); shrink for tiny inputs.
    tile_rows = min(MAX_TILE_ROWS, ((rows + 7) // 8) * 8)
    blocks_total = pl.cdiv(rows, tile_rows)
    steps = pl.cdiv(blocks_total, NUM_CORE_SPLITS)
    last_block = blocks_total - 1

    def in_map(c, j):
        # Clamp so the DMA window always lies within the array; duplicated /
        # out-of-range blocks contribute zero via the in-kernel mask.
        return (jnp.minimum(c * steps + j, last_block), 0)

    kernel = functools.partial(
        _focal_loss_kernel,
        n_valid=n,
        tile_rows=tile_rows,
        steps_per_split=steps,
    )

    # One (8,128) resident partial-sum tile per core split.
    partials = pl.pallas_call(
        kernel,
        out_shape=jax.ShapeDtypeStruct((NUM_CORE_SPLITS, 8, LANES), jnp.float32),
        grid_spec=pltpu.PrefetchScalarGridSpec(
            num_scalar_prefetch=0,
            grid=(NUM_CORE_SPLITS, steps),
            in_specs=[
                pl.BlockSpec((tile_rows, LANES), in_map),
                pl.BlockSpec((tile_rows, LANES), in_map),
            ],
            out_specs=pl.BlockSpec((1, 8, LANES), lambda c, j: (c, 0, 0)),
        ),
        compiler_params=pltpu.CompilerParams(
            dimension_semantics=("parallel", "arbitrary"),
        ),
    )(p2d, t2d)

    # Final cross-lane/cross-split reduce + mean (tiny, done in XLA).
    return jnp.sum(partials) / jnp.float32(n)


def _focal_loss_ref(pred, true):
    x = pred.astype(jnp.float32)
    t = true.astype(jnp.float32)
    bce = jnp.maximum(x, 0.0) - x * t + jnp.log1p(jnp.exp(-jnp.abs(x)))
    p = jax.nn.sigmoid(x)
    p_t = t * p + (1 - t) * (1 - p)
    af = t * ALPHA + (1 - t) * (1 - ALPHA)
    mf = (1.0 - p_t) ** GAMMA
    return jnp.mean(bce * af * mf)


if __name__ == "__main__":
    key = jax.random.PRNGKey(0)
    k1, k2 = jax.random.split(key)
    # NCHW, matching a typical YOLO objectness/cls logit map at small size.
    pred = jax.random.normal(k1, (2, 4, 16, 16), dtype=jnp.float32) * 2.0
    true = (jax.random.uniform(k2, (2, 4, 16, 16)) > 0.7).astype(jnp.float32)

    out = jax.block_until_ready(focal_loss(pred, true))
    ref = _focal_loss_ref(pred, true)
    assert jnp.allclose(out, ref, rtol=1e-5, atol=1e-6), (out, ref)
    print("KERNEL_OK")
</pallas_src>

<mosaic_0001>
module attributes {stable_mosaic.version = 11 : i64} {
  func.func @_focal_loss_kernel(%arg0: i32, %arg1: i32, %arg2: memref<16x128xf32, #tpu.memory_space<vmem>>, %arg3: memref<16x128xf32, #tpu.memory_space<vmem>>, %arg4: memref<1x8x128xf32, #tpu.memory_space<vmem>>) attributes {dimension_semantics = [#tpu.dimension_semantics<parallel>, #tpu.dimension_semantics<arbitrary>], iteration_bounds = array<i64: 2, 1>, scalar_prefetch = 0 : i64, scratch_operands = 0 : i64, tpu.core_type = #tpu.core_type<tc>, window_params = [{transform_indices = @transform_0, window_bounds = array<i64: 16, 128>}, {transform_indices = @transform_1, window_bounds = array<i64: 16, 128>}, {transform_indices = @transform_2, window_bounds = array<i64: 1, 8, 128>}]} {
    %c0_i32 = arith.constant 0 : i32
    %0 = arith.cmpi eq, %arg1, %c0_i32 : i32
    %1 = arith.extui %0 : i1 to i32
    %c0_i32_0 = arith.constant 0 : i32
    %2 = arith.cmpi ne, %1, %c0_i32_0 : i32
    scf.if %2 {
      %cst_22 = arith.constant 0.000000e+00 : f32
      %69 = vector.broadcast %cst_22 : f32 to vector<1x8x128xf32>
      %c0_23 = arith.constant 0 : index
      %c0_24 = arith.constant 0 : index
      %c0_25 = arith.constant 0 : index
      %70 = vector.load %arg4[%c0_23, %c0_24, %c0_25] : memref<1x8x128xf32, #tpu.memory_space<vmem>>, vector<1x8x128xf32>
      tpu.vector_store %arg4[%c0_23, %c0_24, %c0_25], %69 {strides = array<i32>} : memref<1x8x128xf32, #tpu.memory_space<vmem>>, vector<1x8x128xf32>,
    } else {
    }
    %c1_i32 = arith.constant 1 : i32
    %3 = arith.muli %arg0, %c1_i32 : i32
    %4 = arith.addi %3, %arg1 : i32
    %c16_i32 = arith.constant 16 : i32
    %5 = arith.muli %4, %c16_i32 : i32
    %6 = tpu.iota {dimensions = array<i32: 0>} : vector<16x128xi32>
    %7 = vector.broadcast %5 : i32 to vector<16x128xi32>
    %8 = arith.addi %7, %6 : vector<16x128xi32>
    %9 = tpu.iota {dimensions = array<i32: 1>} : vector<16x128xi32>
    %c128_i32 = arith.constant 128 : i32
    %10 = vector.broadcast %c128_i32 : i32 to vector<16x128xi32>
    %11 = arith.muli %8, %10 : vector<16x128xi32>
    %12 = arith.addi %11, %9 : vector<16x128xi32>
    %c2048_i32 = arith.constant 2048 : i32
    %13 = vector.broadcast %c2048_i32 : i32 to vector<16x128xi32>
    %14 = arith.cmpi slt, %12, %13 : vector<16x128xi32>
    %15 = arith.extui %14 : vector<16x128xi1> to vector<16x128xi32>
    %16 = arith.sitofp %15 : vector<16x128xi32> to vector<16x128xf32>
    %c0 = arith.constant 0 : index
    %c0_1 = arith.constant 0 : index
    %17 = vector.load %arg2[%c0, %c0_1] : memref<16x128xf32, #tpu.memory_space<vmem>>, vector<16x128xf32>
    %cst = arith.constant 0.000000e+00 : f32
    %18 = vector.broadcast %cst : f32 to vector<16x128xf32>
    %19 = arith.select %14, %17, %18 : vector<16x128xi1>, vector<16x128xf32>
    %c0_2 = arith.constant 0 : index
    %c0_3 = arith.constant 0 : index
    %20 = vector.load %arg3[%c0_2, %c0_3] : memref<16x128xf32, #tpu.memory_space<vmem>>, vector<16x128xf32>
    %cst_4 = arith.constant 0.000000e+00 : f32
    %21 = vector.broadcast %cst_4 : f32 to vector<16x128xf32>
    %22 = arith.select %14, %20, %21 : vector<16x128xi1>, vector<16x128xf32>
    %23 = math.absf %19 : vector<16x128xf32>
    %cst_5 = arith.constant 0.000000e+00 : f32
    %24 = vector.broadcast %cst_5 : f32 to vector<16x128xf32>
    %25 = arith.subf %24, %23 : vector<16x128xf32>
    %26 = math.exp %25 : vector<16x128xf32>
    %cst_6 = arith.constant 0.000000e+00 : f32
    %27 = vector.broadcast %cst_6 : f32 to vector<16x128xf32>
    %28 = arith.maximumf %19, %27 : vector<16x128xf32>
    %29 = arith.mulf %19, %22 : vector<16x128xf32>
    %30 = arith.subf %28, %29 : vector<16x128xf32>
    %31 = math.log1p %26 : vector<16x128xf32>
    %32 = arith.addf %30, %31 : vector<16x128xf32>
    %cst_7 = arith.constant 1.000000e+00 : f32
    %33 = vector.broadcast %cst_7 : f32 to vector<16x128xf32>
    %34 = arith.addf %33, %26 : vector<16x128xf32>
    %35 = tpu.reciprocal %34 : vector<16x128xf32> -> vector<16x128xf32>
    %cst_8 = arith.constant 0.000000e+00 : f32
    %36 = vector.broadcast %cst_8 : f32 to vector<16x128xf32>
    %37 = arith.cmpf oge, %19, %36 : vector<16x128xf32>
    %38 = arith.mulf %26, %35 : vector<16x128xf32>
    %39 = arith.select %37, %35, %38 : vector<16x128xi1>, vector<16x128xf32>
    %cst_9 = arith.constant 1.000000e+00 : f32
    %40 = vector.broadcast %cst_9 : f32 to vector<16x128xf32>
    %41 = arith.subf %40, %39 : vector<16x128xf32>
    %42 = arith.mulf %22, %41 : vector<16x128xf32>
    %cst_10 = arith.constant 1.000000e+00 : f32
    %43 = vector.broadcast %cst_10 : f32 to vector<16x128xf32>
    %44 = arith.subf %43, %22 : vector<16x128xf32>
    %45 = arith.mulf %44, %39 : vector<16x128xf32>
    %46 = arith.addf %42, %45 : vector<16x128xf32>
    %cst_11 = arith.constant 0.000000e+00 : f32
    %47 = vector.broadcast %cst_11 : f32 to vector<16x128xf32>
    %48 = arith.maximumf %46, %47 : vector<16x128xf32>
    %49 = math.sqrt %48 : vector<16x128xf32>
    %50 = arith.mulf %48, %49 : vector<16x128xf32>
    %cst_12 = arith.constant 2.500000e-01 : f32
    %51 = vector.broadcast %cst_12 : f32 to vector<16x128xf32>
    %52 = arith.mulf %22, %51 : vector<16x128xf32>
    %cst_13 = arith.constant 1.000000e+00 : f32
    %53 = vector.broadcast %cst_13 : f32 to vector<16x128xf32>
    %54 = arith.subf %53, %22 : vector<16x128xf32>
    %cst_14 = arith.constant 7.500000e-01 : f32
    %55 = vector.broadcast %cst_14 : f32 to vector<16x128xf32>
    %56 = arith.mulf %54, %55 : vector<16x128xf32>
    %57 = arith.addf %52, %56 : vector<16x128xf32>
    %58 = arith.mulf %57, %16 : vector<16x128xf32>
    %59 = arith.mulf %32, %58 : vector<16x128xf32>
    %60 = arith.mulf %59, %50 : vector<16x128xf32>
    %61 = vector.shape_cast %60 : vector<16x128xf32> to vector<2x8x128xf32>
    %cst_15 = arith.constant dense<0.000000e+00> : vector<8x128xf32>
    %62 = vector.multi_reduction <add>, %61, %cst_15 [0] : vector<2x8x128xf32> to vector<8x128xf32>
    %c0_16 = arith.constant 0 : index
    %c0_17 = arith.constant 0 : index
    %c0_18 = arith.constant 0 : index
    %63 = vector.load %arg4[%c0_16, %c0_17, %c0_18] : memref<1x8x128xf32, #tpu.memory_space<vmem>>, vector<1x8x128xf32>
    %64 = vector.shape_cast %63 : vector<1x8x128xf32> to vector<8x128xf32>
    %65 = arith.addf %64, %62 : vector<8x128xf32>
    %c0_19 = arith.constant 0 : index
    %c0_20 = arith.constant 0 : index
    %c0_21 = arith.constant 0 : index
    %66 = vector.load %arg4[%c0_19, %c0_20, %c0_21] : memref<1x8x128xf32, #tpu.memory_space<vmem>>, vector<1x8x128xf32>
    %67 = vector.shape_cast %66 : vector<1x8x128xf32> to vector<8x128xf32>
    %68 = vector.shape_cast %65 : vector<8x128xf32> to vector<1x8x128xf32>
    tpu.vector_store %arg4[%c0_19, %c0_20, %c0_21], %68 {strides = array<i32>} : memref<1x8x128xf32, #tpu.memory_space<vmem>>, vector<1x8x128xf32>,
    return
  }
  func.func @transform_0(%arg0: i32, %arg1: i32) -> (i32, i32) {
    %c1_i32 = arith.constant 1 : i32
    %0 = arith.muli %arg0, %c1_i32 : i32
    %1 = arith.addi %0, %arg1 : i32
    %c0_i32 = arith.constant 0 : i32
    %2 = arith.minsi %1, %c0_i32 : i32
    %c0_i32_0 = arith.constant 0 : i32
    %c0_i32_1 = arith.constant 0 : i32
    return %2, %c0_i32_0 : i32, i32
  }
  func.func @transform_1(%arg0: i32, %arg1: i32) -> (i32, i32) {
    %c1_i32 = arith.constant 1 : i32
    %0 = arith.muli %arg0, %c1_i32 : i32
    %1 = arith.addi %0, %arg1 : i32
    %c0_i32 = arith.constant 0 : i32
    %2 = arith.minsi %1, %c0_i32 : i32
    %c0_i32_0 = arith.constant 0 : i32
    %c0_i32_1 = arith.constant 0 : i32
    return %2, %c0_i32_0 : i32, i32
  }
  func.func @transform_2(%arg0: i32, %arg1: i32) -> (i32, i32, i32) {
    %c0_i32 = arith.constant 0 : i32
    %c0_i32_0 = arith.constant 0 : i32
    %c0_i32_1 = arith.constant 0 : i32
    return %arg0, %c0_i32, %c0_i32_0 : i32, i32, i32
  }
}

</mosaic_0001>

<llo_original>
// kernel: tpu_custom_call.1
$region0: #{tpu_custom_call.1}
  #allocation0 [shape = 'u32[]', space=smem, size = 0x4, offset = 0x4, fixed_abs, tag = 'smem constant byte address 0x4 - core index']
  #allocation1 [shape = 'u32[72,128]{1,0:T(1,128)}', space=vmem, size = 0x9000, scoped, tag = 'internal scratch']
  %s0 = inlined_call_operand.hbm [shape: f32[16,128], index: 0, kind: input, shape index: {}]
  %s1 = inlined_call_operand.hbm [shape: f32[16,128], index: 1, kind: input, shape index: {}]
  %s2 = inlined_call_operand.hbm [shape: f32[2,8,128], index: 2, kind: output, shape index: {}]
  %s3 = sld [smem:[#allocation0]]
  $region53: #{tpu_custom_call.1} parent=0
    _
  %s5 = ssub.s32 1, %s3
  %s6 = scalar_select 0, %s5, %s3
  $region1: #{tpu_custom_call.1} parent=0
    #allocation2 [shape = 'u8[16384]{0}', space=vmem, size = 0x4000, scoped, tag = 'input window, operand 0']
    #allocation3 [shape = 's32[2]{0}', space=sflag, size = 0x8, scoped, tag = 'scoped memory for tpu_custom_call.1']
    #allocation4 [shape = 's32[2]{0}', space=sflag, size = 0x8, scoped, tag = 'scoped memory for tpu_custom_call.1']
    #allocation5 [shape = 'u8[16384]{0}', space=vmem, size = 0x4000, scoped, tag = 'input window, operand 1']
    #allocation6 [shape = 's32[2]{0}', space=sflag, size = 0x8, scoped, tag = 'scoped memory for tpu_custom_call.1']
    #allocation7 [shape = 'u8[8192]{0}', space=vmem, size = 0x2000, scoped, tag = 'output window, operand 0']
    %7 = vsyncpa [#allocation3], 0
    %s8 = scalar_lea.sflag [#allocation3], 1
    %9 = vsyncpa %s8, 0
    %10 = vsyncpa [#allocation6], 0
    %s11 = scalar_lea.sflag [#allocation6], 1
    %12 = vsyncpa %s11, 0
    %13 = vsyncpa [#allocation4], 0
    %s14 = scalar_lea.sflag [#allocation4], 1
    %15 = vsyncpa %s14, 0
    loop: start=0, step=1, limit=4
    $region2: #{tpu_custom_call.1} parent=1 // loop_pre_header
      _
    $region3: #{tpu_custom_call.1} parent=1 // loop_header
      %s17 = sphi 0, %s21
      %p18 = scmp.ge.s32.totalorder %s17, 4
      %s24 = sphi 0, %s36
      %s25 = sphi 0, %s32
      %s26 = sphi 0, %s24
      %s27 = sphi 0, %s25
      %s28 = sphi 0, %s26
      %s29 = sphi 0, %s27
      %s45 = sphi 0, %s47
      %s48 = sphi 0, %s45
      %s49 = sphi 0, %s48
      %s65 = sphi 0, %s49
      %s77 = sphi 0, %s79
      %s80 = sphi 0, %s77
      %s81 = sphi 0, %s80
      %s97 = sphi 0, %s81
      %s103 = sphi 0, %s105
      %s106 = sphi 0, %s103
      %s107 = sphi 0, %s106
      %s123 = sphi 0, %s107
    $region4: #{tpu_custom_call.1} parent=1 // loop_header_branch
      %20 = sbr.rel (%p18) target = $region8
    $region5: #{tpu_custom_call.1} parent=1 // loop_body
      %s22 = ssub.s32 %s17, 1
      %s23 = ssub.s32 %s17, 2
      %s30 = sadd.s32 1, %s25
      %p31 = scmp.ge.s32.totalorder %s30, 1
      %s32 = scalar_select %p31, 0, %s30
      %s33 = sadd.s32 1, %s24
      %s34 = scalar_select %p31, %s33, %s24
      %p35 = scmp.ge.s32.totalorder %s34, 2
      %s36 = scalar_select %p35, 0, %s34
      %s37 = sadd.s32 %s24, %s25
      %p38 = scmp.lt.s32.totalorder %s37, 0
      %s39 = scalar_select %p38, %s37, 0
      %s40 = sadd.s32 %s36, %s32
      %p41 = scmp.lt.s32.totalorder %s40, 0
      %s42 = scalar_select %p41, %s40, 0
      %s43 = ssub.s32 %s39, %s42
      %p44 = scmp.eq.s32.totalorder %s43, 0
      %s46 = sadd.s32 %s45, 1
      %s47 = scalar_select %p44, %s45, %s46
      %p50 = pneg %p44
      %p51 = scmp.eq.s32.totalorder %s17, 1
      %p52 = por %p50, %p51
      %p53 = scmp.ne.s32.totalorder %s45, %s48
      %p54 = scmp.eq.s32.totalorder %s17, 0
      %p55 = por %p53, %p54
      %p56 = scmp.ne.s32.totalorder %s45, %s48
      %p57 = scmp.eq.s32.totalorder %s22, 1
      %p58 = por %p56, %p57
      %p59 = scmp.ne.s32.totalorder %s48, %s49
      %p60 = scmp.eq.s32.totalorder %s22, 0
      %p61 = por %p59, %p60
      %p62 = scmp.ne.s32.totalorder %s48, %s49
      %p63 = scmp.eq.s32.totalorder %s23, 1
      %p64 = por %p62, %p63
      %p66 = scmp.ne.s32.totalorder %s49, %s65
      %p67 = scmp.eq.s32.totalorder %s23, 0
      %p68 = por %p66, %p67
      %s69 = sadd.s32 %s24, %s25
      %p70 = scmp.lt.s32.totalorder %s69, 0
      %s71 = scalar_select %p70, %s69, 0
      %s72 = sadd.s32 %s36, %s32
      %p73 = scmp.lt.s32.totalorder %s72, 0
      %s74 = scalar_select %p73, %s72, 0
      %s75 = ssub.s32 %s71, %s74
      %p76 = scmp.eq.s32.totalorder %s75, 0
      %s78 = sadd.s32 %s77, 1
      %s79 = scalar_select %p76, %s77, %s78
      %p82 = pneg %p76
      %p83 = scmp.eq.s32.totalorder %s17, 1
      %p84 = por %p82, %p83
      %p85 = scmp.ne.s32.totalorder %s77, %s80
      %p86 = scmp.eq.s32.totalorder %s17, 0
      %p87 = por %p85, %p86
      %p88 = scmp.ne.s32.totalorder %s77, %s80
      %p89 = scmp.eq.s32.totalorder %s22, 1
      %p90 = por %p88, %p89
      %p91 = scmp.ne.s32.totalorder %s80, %s81
      %p92 = scmp.eq.s32.totalorder %s22, 0
      %p93 = por %p91, %p92
      %p94 = scmp.ne.s32.totalorder %s80, %s81
      %p95 = scmp.eq.s32.totalorder %s23, 1
      %p96 = por %p94, %p95
      %p98 = scmp.ne.s32.totalorder %s81, %s97
      %p99 = scmp.eq.s32.totalorder %s23, 0
      %p100 = por %p98, %p99
      %s101 = ssub.s32 %s24, %s36
      %p102 = scmp.eq.s32.totalorder %s101, 0
      %s104 = sadd.s32 %s103, 1
      %s105 = scalar_select %p102, %s103, %s104
      %p108 = pneg %p102
      %p109 = scmp.eq.s32.totalorder %s17, 1
      %p110 = por %p108, %p109
      %p111 = scmp.ne.s32.totalorder %s103, %s106
      %p112 = scmp.eq.s32.totalorder %s17, 0
      %p113 = por %p111, %p112
      %p114 = scmp.ne.s32.totalorder %s103, %s106
      %p115 = scmp.eq.s32.totalorder %s22, 1
      %p116 = por %p114, %p115
      %p117 = scmp.ne.s32.totalorder %s106, %s107
      %p118 = scmp.eq.s32.totalorder %s22, 0
      %p119 = por %p117, %p118
      %p120 = scmp.ne.s32.totalorder %s106, %s107
      %p121 = scmp.eq.s32.totalorder %s23, 1
      %p122 = por %p120, %p121
      %p124 = scmp.ne.s32.totalorder %s107, %s123
      %p125 = scmp.eq.s32.totalorder %s23, 0
      %p126 = por %p124, %p125
      %p127 = scmp.le.s32.totalorder 1, %s17
      %p128 = scmp.lt.s32.totalorder %s17, 3
      %p129 = pnand %p127, %p128
      %p130 = pneg %p129
      // Predicated region
      $region9: #{tpu_custom_call.1} parent=5 // pred_check
        _
      $region10: #{tpu_custom_call.1} parent=5 // pred_check_branch
        %132 = sbr.rel (%p129) target = $region12
      $region11: #{tpu_custom_call.1} parent=5 // pred_region
        %s133 = ssub.s32 %s17, 1
      $region12: #{tpu_custom_call.1} parent=5 // pred_fallthru
        _
      %p134 = scmp.lt.s32.totalorder %s17, 2
      // Predicated region
      $region13: #{tpu_custom_call.1} parent=5 // pred_check
        %p135 = pneg %p134
      $region14: #{tpu_custom_call.1} parent=5 // pred_check_branch
        %137 = sbr.rel (%p135) target = $region16
      $region15: #{tpu_custom_call.1} parent=5 // pred_region
        // Predicated region
        $region17: #{tpu_custom_call.1} parent=15 // pred_check
          %p138 = pneg %p55
        $region18: #{tpu_custom_call.1} parent=15 // pred_check_branch
          %140 = sbr.rel (%p138) target = $region20
        $region19: #{tpu_custom_call.1} parent=15 // pred_region
          %s141 = sand.u32 %s45, 1
          %s142 = scalar_lea.sflag [#allocation3], %s141
          %s143 = sand.u32 %s45, 1
          %s144 = smul.addr %s143, 16
          %s145 = scalar_lea.vmem [#allocation2], %s144
          %s146 = sadd.s32 %s24, %s25
          %p147 = scmp.lt.s32.totalorder %s146, 0
          %s148 = scalar_select %p147, %s146, 0
          %s149 = smul.u32 2, %s148
          %151 = vsyncadd %s142, 0
          %s152 = smul.addr %s149, 8
          %s153 = scalar_lea.hbm %s0, %s152
          %s154 = sshll.u32 %s153, 4
          %s155 = int_to_ptr.hbm [resolvable:$true] %s154
          %s156 = sshll.u32 %s145, 4
          %s157 = int_to_ptr.vmem [resolvable:$true] %s156
          %162 = dma.hbm_to_vmem [thread:$0]  %s155, 256, %s157, %s142, 128, 128, 8
        $region20: #{tpu_custom_call.1} parent=15 // pred_fallthru
          _
        // Predicated region
        $region21: #{tpu_custom_call.1} parent=15 // pred_check
          %p163 = pneg %p87
        $region22: #{tpu_custom_call.1} parent=15 // pred_check_branch
          %165 = sbr.rel (%p163) target = $region24
        $region23: #{tpu_custom_call.1} parent=15 // pred_region
          %s166 = sand.u32 %s77, 1
          %s167 = scalar_lea.sflag [#allocation6], %s166
          %s168 = sand.u32 %s77, 1
          %s169 = smul.addr %s168, 16
          %s170 = scalar_lea.vmem [#allocation5], %s169
          %s171 = sadd.s32 %s24, %s25
          %p172 = scmp.lt.s32.totalorder %s171, 0
          %s173 = scalar_select %p172, %s171, 0
          %s174 = smul.u32 2, %s173
          %176 = vsyncadd %s167, 0
          %s177 = smul.addr %s174, 8
          %s178 = scalar_lea.hbm %s1, %s177
          %s179 = sshll.u32 %s178, 4
          %s180 = int_to_ptr.hbm [resolvable:$true] %s179
          %s181 = sshll.u32 %s170, 4
          %s182 = int_to_ptr.vmem [resolvable:$true] %s181
          %187 = dma.hbm_to_vmem [thread:$0]  %s180, 256, %s182, %s167, 128, 128, 8
        $region24: #{tpu_custom_call.1} parent=15 // pred_fallthru
          _
      $region16: #{tpu_custom_call.1} parent=5 // pred_fallthru
        _
      %p188 = scmp.le.s32.totalorder 1, %s17
      %p189 = scmp.lt.s32.totalorder %s17, 3
      %p190 = pnand %p188, %p189
      %p191 = pneg %p190
      // Predicated region
      $region25: #{tpu_custom_call.1} parent=5 // pred_check
        _
      $region26: #{tpu_custom_call.1} parent=5 // pred_check_branch
        %193 = sbr.rel (%p190) target = $region28
      $region27: #{tpu_custom_call.1} parent=5 // pred_region
        %s194 = ssub.s32 %s17, 1
        %s195 = sand.u32 %s48, 1
        %s196 = scalar_lea.sflag [#allocation3], %s195
        %s197 = sand.u32 %s48, 1
        %s198 = smul.addr %s197, 16
        %s199 = scalar_lea.vmem [#allocation2], %s198
        // Predicated region
        $region29: #{tpu_custom_call.1} parent=27 // pred_check
          %p200 = pneg %p61
        $region30: #{tpu_custom_call.1} parent=27 // pred_check_branch
          %202 = sbr.rel (%p200) target = $region32
        $region31: #{tpu_custom_call.1} parent=27 // pred_region
          %204 = dma.done %s196, 256
        $region32: #{tpu_custom_call.1} parent=27 // pred_fallthru
          _
        %s205 = sand.u32 %s80, 1
        %s206 = scalar_lea.sflag [#allocation6], %s205
        %s207 = sand.u32 %s80, 1
        %s208 = smul.addr %s207, 16
        %s209 = scalar_lea.vmem [#allocation5], %s208
        // Predicated region
        $region33: #{tpu_custom_call.1} parent=27 // pred_check
          %p210 = pneg %p93
        $region34: #{tpu_custom_call.1} parent=27 // pred_check_branch
          %212 = sbr.rel (%p210) target = $region36
        $region35: #{tpu_custom_call.1} parent=27 // pred_region
          %214 = dma.done %s206, 256
        $region36: #{tpu_custom_call.1} parent=27 // pred_fallthru
          _
        %s215 = sand.u32 %s48, 1
        %s216 = scalar_lea.sflag [#allocation3], %s215
        %s217 = sand.u32 %s48, 1
        %s218 = smul.addr %s217, 16
        %s219 = scalar_lea.vmem [#allocation2], %s218
        %p220 = pneg %p61
        %p221 = pneg %p58
        %s222 = sand.u32 %s80, 1
        %s223 = scalar_lea.sflag [#allocation6], %s222
        %s224 = sand.u32 %s80, 1
        %s225 = smul.addr %s224, 16
        %s226 = scalar_lea.vmem [#allocation5], %s225
        %p227 = pneg %p93
        %p228 = pneg %p90
        %p229 = pneg %p119
        %p230 = pneg %p116
        %s231 = sand.u32 %s106, 1
        %s232 = scalar_lea.sflag [#allocation4], %s231
        %s233 = sand.u32 %s106, 1
        %s234 = smul.addr %s233, 8
        %s235 = scalar_lea.vmem [#allocation7], %s234
        %s236 = sadd.s32 %s26, %s27
        %p237 = scmp.lt.s32.totalorder %s236, 0
        %s238 = scalar_select %p237, %s236, 0
        %s239 = smul.u32 2, %s238
        %s240 = sadd.s32 %s26, %s27
        %p241 = scmp.lt.s32.totalorder %s240, 0
        %s242 = scalar_select %p241, %s240, 0
        %s243 = smul.u32 2, %s242
        %p244 = scmp.eq.s32.totalorder %s27, 0
        // Predicated region
        $region37: #{tpu_custom_call.1} parent=27 // pred_check
          %p245 = pneg %p244
        $region38: #{tpu_custom_call.1} parent=27 // pred_check_branch
          %247 = sbr.rel (%p245) target = $region40
        $region39: #{tpu_custom_call.1} parent=27 // pred_region
          %248 = vst [vmem:[%s235] sm:$0xff] 0.0
        $region40: #{tpu_custom_call.1} parent=27 // pred_fallthru
          _
        %s249 = sadd.s32 %s26, %s27
        %s250 = smul.u32 %s249, 16
        %v251 = vlaneseq
        %v252 = vshrl.u32 %v251, 7
        %v253 = vadd.s32 %v252, 8
        %v254 = vstv %s250
        %v255 = vadd.s32 %v254, %v252
        %v256 = vadd.s32 %v254, %v253
        %v257 = vlaneseq
        %v258 = vand.u32 %v257, 127
        %v259 = vmul.u32 %v255, 128
        %v260 = vmul.u32 %v256, 128
        %v261 = vadd.s32 %v259, %v258
        %v262 = vadd.s32 %v260, %v258
        %vm263 = vcmp.lt.s32.totalorder %v261, 2048
        %vm264 = vcmp.lt.s32.totalorder %v262, 2048
        %v265 = vsel %vm263, 1, 0
        %v266 = vsel %vm264, 1, 0
        %v267 = vcvt.s32.f32 %v265
        %v268 = vcvt.s32.f32 %v266
        %v269 = vld [vmem:[%s199] sm:$0xff]
        %v270 = vld [vmem:[%s199 + $0x8] sm:$0xff]
        %v271 = vsel %vm263, %v269, 0.0
        %v272 = vsel %vm264, %v270, 0.0
        %v273 = vld [vmem:[%s209] sm:$0xff]
        %v274 = vld [vmem:[%s209 + $0x8] sm:$0xff]
        %v275 = vsel %vm263, %v273, 0.0
        %v276 = vsel %vm264, %v274, 0.0
        %v277 = vand.u32 2147483647, %v271
        %v278 = vand.u32 2147483647, %v272
        %v279 = vsub.f32 0.0, %v277
        %v280 = vsub.f32 0.0, %v278
        %v281 = vmul.f32 %v279, 1.442695
        %v282 = vpow.pop %v281
        %v283 = vmul.f32 %v280, 1.442695
        %v284 = vpow.pop %v283
        %v285 = vmax.f32 %v271, 0.0
        %v286 = vmax.f32 %v272, 0.0
        %v287 = vmul.f32 %v271, %v275
        %v288 = vmul.f32 %v272, %v276
        %v289 = vsub.f32 %v285, %v287
        %v290 = vsub.f32 %v286, %v288
        %v291 = vadd.f32 %v282, 1.0
        %v292 = vlog2.pop %v291
        %v293 = vmul.f32 %v292, 0.6931472
        %v294 = vmul.f32 -0.5, %v282
        %v295 = vadd.f32 %v294, 1.0
        %v296 = vmul.f32 %v295, %v282
        %v297 = vand.u32 2147483647, %v282
        %vm298 = vcmp.lt.f32.partialorder %v297, 0.0004427343
        %v299 = vsel %vm298, %v296, %v293
        %v300 = vadd.f32 %v284, 1.0
        %v301 = vlog2.pop %v300
        %v302 = vmul.f32 %v301, 0.6931472
        %v303 = vmul.f32 -0.5, %v284
        %v304 = vadd.f32 %v303, 1.0
        %v305 = vmul.f32 %v304, %v284
        %v306 = vand.u32 2147483647, %v284
        %vm307 = vcmp.lt.f32.partialorder %v306, 0.0004427343
        %v308 = vsel %vm307, %v305, %v302
        %v309 = vadd.f32 %v289, %v299
        %v310 = vadd.f32 %v290, %v308
        %v311 = vadd.f32 %v282, 1.0
        %v312 = vadd.f32 %v284, 1.0
        %v313 = vrcp.pop %v311
        %v314 = vmul.f32 %v311, %v313
        %v315 = vsub.f32 1.0, %v314
        %v316 = vmul.f32 %v313, %v315
        %v317 = vadd.f32 %v313, %v316
        %vm318 = vweird.f32 %v311
        %vm319 = vweird.f32 %v313
        %vm320 = vmor %vm318, %vm319
        %v321 = vsel %vm320, %v313, %v317
        %v322 = vand.u32 2147483647, %v311
        %vm323 = vcmp.eq.f32.partialorder %v322, 8.507059e+37
        %v324 = vand.u32 %v311, 2147483648
        %v325 = vor.u32 1.1754944e-38, %v324
        %v326 = vsel %vm323, %v325, %v321
        %v327 = vrcp.pop %v312
        %v328 = vmul.f32 %v312, %v327
        %v329 = vsub.f32 1.0, %v328
        %v330 = vmul.f32 %v327, %v329
        %v331 = vadd.f32 %v327, %v330
        %vm332 = vweird.f32 %v312
        %vm333 = vweird.f32 %v327
        %vm334 = vmor %vm332, %vm333
        %v335 = vsel %vm334, %v327, %v331
        %v336 = vand.u32 2147483647, %v312
        %vm337 = vcmp.eq.f32.partialorder %v336, 8.507059e+37
        %v338 = vand.u32 %v312, 2147483648
        %v339 = vor.u32 1.1754944e-38, %v338
        %v340 = vsel %vm337, %v339, %v335
        %vm341 = vcmp.ge.f32.partialorder %v271, 0.0
        %vm342 = vcmp.ge.f32.partialorder %v272, 0.0
        %v343 = vmul.f32 %v282, %v326
        %v344 = vmul.f32 %v284, %v340
        %v345 = vsel %vm341, %v326, %v343
        %v346 = vsel %vm342, %v340, %v344
        %v347 = vsub.f32 1.0, %v345
        %v348 = vsub.f32 1.0, %v346
        %v349 = vmul.f32 %v275, %v347
        %v350 = vmul.f32 %v276, %v348
        %v351 = vsub.f32 1.0, %v275
        %v352 = vsub.f32 1.0, %v276
        %v353 = vmul.f32 %v351, %v345
        %v354 = vmul.f32 %v352, %v346
        %v355 = vadd.f32 %v349, %v353
        %v356 = vadd.f32 %v350, %v354
        %v357 = vmax.f32 %v355, 0.0
        %v358 = vmax.f32 %v356, 0.0
        %v359 = vrsqrt.pop %v357
        %v360 = vmul.f32 %v359, %v357
        %v361 = vmul.f32 %v360, %v359
        %v362 = vmul.f32 0.5, %v361
        %v363 = vsub.f32 1.5, %v362
        %v364 = vmul.f32 %v359, %v363
        %v365 = vmul.f32 %v357, %v364
        %vm366 = vcmp.eq.f32.partialorder %v357, inf
        %v367 = vsel %vm366, %v357, %v365
        %vm368 = vcmp.eq.f32.partialorder %v357, 0.0
        %v369 = vand.u32 %v357, 2147483648
        %v370 = vsel %vm368, %v369, %v367
        %v371 = vrsqrt.pop %v358
        %v372 = vmul.f32 %v371, %v358
        %v373 = vmul.f32 %v372, %v371
        %v374 = vmul.f32 0.5, %v373
        %v375 = vsub.f32 1.5, %v374
        %v376 = vmul.f32 %v371, %v375
        %v377 = vmul.f32 %v358, %v376
        %vm378 = vcmp.eq.f32.partialorder %v358, inf
        %v379 = vsel %vm378, %v358, %v377
        %vm380 = vcmp.eq.f32.partialorder %v358, 0.0
        %v381 = vand.u32 %v358, 2147483648
        %v382 = vsel %vm380, %v381, %v379
        %v383 = vmul.f32 %v357, %v370
        %v384 = vmul.f32 %v358, %v382
        %v385 = vmul.f32 %v275, 0.25
        %v386 = vmul.f32 %v276, 0.25
        %v387 = vmul.f32 %v351, 0.75
        %v388 = vmul.f32 %v352, 0.75
        %v389 = vadd.f32 %v385, %v387
        %v390 = vadd.f32 %v386, %v388
        %v391 = vmul.f32 %v389, %v267
        %v392 = vmul.f32 %v390, %v268
        %v393 = vmul.f32 %v309, %v391
        %v394 = vmul.f32 %v310, %v392
        %v395 = vmul.f32 %v393, %v383
        %v396 = vmul.f32 %v394, %v384
        %v397 = vadd.f32 %v395, %v396
        %v398 = vld [vmem:[%s235] sm:$0xff]
        %v399 = vadd.f32 %v398, %v397
        %400 = vst [vmem:[%s235] sm:$0xff] %v399
        %s401 = sand.u32 %s106, 1
        %s402 = scalar_lea.sflag [#allocation4], %s401
        %s403 = sand.u32 %s106, 1
        %s404 = smul.addr %s403, 8
        %s405 = scalar_lea.vmem [#allocation7], %s404
        // Predicated region
        $region41: #{tpu_custom_call.1} parent=27 // pred_check
          %p406 = pneg %p116
        $region42: #{tpu_custom_call.1} parent=27 // pred_check_branch
          %408 = sbr.rel (%p406) target = $region44
        $region43: #{tpu_custom_call.1} parent=27 // pred_region
          %410 = vsyncadd %s402, 0
          %s411 = smul.addr %s26, 8
          %s412 = scalar_lea.hbm %s2, %s411
          %s414 = sshll.u32 %s405, 4
          %s415 = int_to_ptr.vmem [resolvable:$true] %s414
          %s416 = sshll.u32 %s412, 4
          %s417 = int_to_ptr.hbm [resolvable:$true] %s416
          %419 = dma.vmem_to_hbm [thread:$0]  %s415, 128, %s417, %s402
        $region44: #{tpu_custom_call.1} parent=27 // pred_fallthru
          _
      $region28: #{tpu_custom_call.1} parent=5 // pred_fallthru
        _
      %p420 = scmp.le.s32.totalorder 2, %s17
      // Predicated region
      $region45: #{tpu_custom_call.1} parent=5 // pred_check
        %p421 = pneg %p420
      $region46: #{tpu_custom_call.1} parent=5 // pred_check_branch
        %423 = sbr.rel (%p421) target = $region48
      $region47: #{tpu_custom_call.1} parent=5 // pred_region
        %s424 = ssub.s32 %s17, 2
        // Predicated region
        $region49: #{tpu_custom_call.1} parent=47 // pred_check
          %p425 = pneg %p122
        $region50: #{tpu_custom_call.1} parent=47 // pred_check_branch
          %427 = sbr.rel (%p425) target = $region52
        $region51: #{tpu_custom_call.1} parent=47 // pred_region
          %s428 = sand.u32 %s107, 1
          %s429 = scalar_lea.sflag [#allocation4], %s428
          %s430 = sand.u32 %s107, 1
          %s431 = smul.addr %s430, 8
          %s432 = scalar_lea.vmem [#allocation7], %s431
          %434 = dma.done %s429, 128
        $region52: #{tpu_custom_call.1} parent=47 // pred_fallthru
          _
      $region48: #{tpu_custom_call.1} parent=5 // pred_fallthru
        _
    $region6: #{tpu_custom_call.1} parent=1 // loop_footer
      %s21 = sadd.s32 1, %s17
    $region7: #{tpu_custom_call.1} parent=1 // loop_footer_branch
      %16 = sbr.rel target = $region3
    $region8: #{tpu_custom_call.1} parent=1 // loop_exit
      _
    %435 = vsyncpa [#allocation3], 1
    %s436 = scalar_lea.sflag [#allocation3], 1
    %437 = vsyncpa %s436, 1
    %438 = vsyncpa [#allocation6], 1
    %s439 = scalar_lea.sflag [#allocation6], 1
    %440 = vsyncpa %s439, 1
    %441 = vsyncpa [#allocation4], 1
    %s442 = scalar_lea.sflag [#allocation4], 1
    %443 = vsyncpa %s442, 1

</llo_original>
